<compile_context>
chip_gen: v7x
topology: tpu7x:2x2x1
jax: 0.10.0
libtpu: 0.0.40
codegen_flags: <defaults>
</compile_context>

<pallas_src>
import math

import jax
import jax.numpy as jnp
from jax import lax
from jax.experimental import pallas as pl
from jax.experimental.pallas import tpu as pltpu

_LANE = 128
# Budget for the double-buffered activation+output blocks; fits with headroom
# inside the 32 MiB scoped-VMEM limit we request (<= physical VMEM on v5e/v6e/v7x).
_WORKING_SET_BYTES = 24 * 1024 * 1024
_VMEM_LIMIT_BYTES = 32 * 1024 * 1024


def _conv1x1_kernel(w_ref, b_ref, x_ref, o_ref):
    # w_ref: (c_out, c_in), b_ref: (c_out, 1)
    # x_ref: (Bt, c_in, t_sp), o_ref: (Bt, c_out, t_sp)
    w = w_ref[...]
    bias = b_ref[...]
    # Static unroll over the (small) per-block batch count: one MXU matmul per
    # batch element, lane-dense full-width stores.
    for i in range(x_ref.shape[0]):
        acc = jnp.dot(
            w,
            x_ref[i],
            preferred_element_type=jnp.float32,
            precision=lax.Precision.HIGHEST,
        )
        o_ref[i] = (acc + bias).astype(o_ref.dtype)


def _conv1x1_nchw_pallas(x, w, b, *, max_tile_lanes=8192):
    """1x1 conv in NCHW via Pallas.

    x: (B, c_in, T, V) float32
    w: (c_out, c_in)   float32
    b: (c_out,)        float32
    returns (B, c_out, T, V)
    """
    B, c_in, T, V = x.shape
    c_out = w.shape[0]
    S = T * V
    itemsize = jnp.dtype(x.dtype).itemsize

    # Free reshapes (trailing contiguous dims merge): channels stay on sublanes,
    # spatial goes on lanes.
    x3 = x.reshape(B, c_in, S)
    b2 = b.reshape(c_out, 1)

    S_groups = pl.cdiv(S, _LANE)  # spatial extent in 128-lane groups

    # --- VMEM-budget-derived tiling -------------------------------------------
    # Reserve the (double-buffered) weight/bias, then split the remaining budget
    # over double-buffered (c_in + c_out)-row, 128-lane column groups.
    resident = 2 * (c_out * c_in + c_out) * itemsize
    bytes_per_group = 2 * (c_in + c_out) * _LANE * itemsize  # dbl-buffered, Bt=1
    budget = max(_WORKING_SET_BYTES - resident, bytes_per_group)
    groups_budget = max(1, budget // bytes_per_group)

    # Spatial tiling: cap by budget and max_tile_lanes, then equalize tiles so
    # every grid step (and each v7x TensorCore shard) does the same work.
    cap_groups = max(1, min(max_tile_lanes // _LANE, groups_budget))
    num_sp_tiles = pl.cdiv(S_groups, cap_groups)
    t_groups = pl.cdiv(S_groups, num_sp_tiles)
    t_sp = t_groups * _LANE

    # Batch blocking: if the whole padded spatial extent fits in one tile and
    # B > 1, fold batch elements into each block (bigger contiguous DMAs, fewer
    # grid steps), keeping >= 2 grid steps for megacore whenever B >= 2.
    bt = 1
    if num_sp_tiles == 1 and B > 1:
        bt_cap = max(1, groups_budget // t_groups)
        if bt_cap >= 2:
            num_b_tiles = min(B, max(2, pl.cdiv(B, bt_cap)))
            bt = pl.cdiv(B, num_b_tiles)
    num_b_tiles = pl.cdiv(B, bt)

    grid = (num_b_tiles, num_sp_tiles)

    cost = pl.CostEstimate(
        flops=2 * B * S * c_in * c_out,
        transcendentals=0,
        bytes_accessed=itemsize * (B * S * (c_in + c_out) + c_in * c_out + c_out),
    )

    out3 = pl.pallas_call(
        _conv1x1_kernel,
        out_shape=jax.ShapeDtypeStruct((B, c_out, S), x.dtype),
        grid_spec=pltpu.PrefetchScalarGridSpec(
            num_scalar_prefetch=0,
            grid=grid,
            in_specs=[
                pl.BlockSpec((c_out, c_in), lambda bi, j: (0, 0)),  # weight (resident)
                pl.BlockSpec((c_out, 1), lambda bi, j: (0, 0)),     # bias   (resident)
                pl.BlockSpec((bt, c_in, t_sp), lambda bi, j: (bi, 0, j)),
            ],
            out_specs=pl.BlockSpec((bt, c_out, t_sp), lambda bi, j: (bi, 0, j)),
        ),
        compiler_params=pltpu.CompilerParams(
            dimension_semantics=("parallel", "parallel"),
            vmem_limit_bytes=_VMEM_LIMIT_BYTES,
        ),
        cost_estimate=cost,
    )(w, b2, x3)

    # Free reshape back to NCHW.
    return out3.reshape(B, c_out, T, V)


class AlignPallas:
    """JAX/Pallas port of the PyTorch Align module (forward pass)."""

    def __init__(self, c_in, c_out, key=None):
        self.c_in = c_in
        self.c_out = c_out
        if key is None:
            key = jax.random.PRNGKey(0)
        kw, kb = jax.random.split(key)
        # nn.Conv2d(c_in, c_out, kernel_size=(1,1)) parameters:
        #   weight: (c_out, c_in, 1, 1) -> stored as (c_out, c_in), bias: (c_out,)
        # Kaiming-uniform-style init (a=sqrt(5)), like PyTorch default.
        fan_in = c_in  # 1x1 kernel
        gain = math.sqrt(2.0 / (1.0 + 5.0))
        bound_w = gain * math.sqrt(3.0 / fan_in)
        bound_b = 1.0 / math.sqrt(fan_in)
        self.weight = jax.random.uniform(
            kw, (c_out, c_in), jnp.float32, minval=-bound_w, maxval=bound_w
        )
        self.bias = jax.random.uniform(
            kb, (c_out,), jnp.float32, minval=-bound_b, maxval=bound_b
        )

    def __call__(self, x):
        # x: (batch, c_in, timestep, n_vertex)  [NCHW]
        if self.c_in > self.c_out:
            return _conv1x1_nchw_pallas(x, self.weight, self.bias)
        elif self.c_in < self.c_out:
            # Single pad op on the channel axis (no zeros+concat materialization).
            return jnp.pad(x, ((0, 0), (0, self.c_out - self.c_in), (0, 0), (0, 0)))
        else:
            return x


def _reference_align(x, weight, bias, c_in, c_out):
    """Pure-JAX reference implementing the PyTorch semantics."""
    if c_in > c_out:
        return jnp.einsum("nchw,oc->nohw", x, weight) + bias[None, :, None, None]
    elif c_in < c_out:
        return jnp.pad(x, ((0, 0), (0, c_out - c_in), (0, 0), (0, 0)))
    else:
        return x


if __name__ == "__main__":
    key = jax.random.PRNGKey(0)
    k_x, k_p, k_x2, k_x3, k_x4 = jax.random.split(key, 5)

    # --- branch 1: c_in > c_out  (Pallas NCHW 1x1-conv kernel) ----------------
    batch, c_in, c_out, timestep, n_vertex = 2, 8, 4, 8, 16
    x = jax.random.normal(k_x, (batch, c_in, timestep, n_vertex), jnp.float32)

    align = AlignPallas(c_in, c_out, key=k_p)
    y = jax.block_until_ready(align(x))

    y_ref = _reference_align(x, align.weight, align.bias, c_in, c_out)
    assert y.shape == (batch, c_out, timestep, n_vertex)
    assert jnp.allclose(y, y_ref, atol=1e-5, rtol=1e-5)

    # --- branch 1b: spatial size not a multiple of 128 (masked last block) ----
    t_odd, v_odd = 5, 20   # S = 100 < 128 -> partially OOB spatial tile
    x_odd = jax.random.normal(k_x3, (batch, c_in, t_odd, v_odd), jnp.float32)
    y_odd = jax.block_until_ready(align(x_odd))
    y_odd_ref = _reference_align(x_odd, align.weight, align.bias, c_in, c_out)
    assert y_odd.shape == (batch, c_out, t_odd, v_odd)
    assert jnp.allclose(y_odd, y_odd_ref, atol=1e-5, rtol=1e-5)

    # --- branch 1c: batch-blocked path (B=5 -> Bt=3, last block OOB in batch) -
    x_big = jax.random.normal(k_x4, (5, c_in, timestep, n_vertex), jnp.float32)
    y_big = jax.block_until_ready(align(x_big))
    y_big_ref = _reference_align(x_big, align.weight, align.bias, c_in, c_out)
    assert y_big.shape == (5, c_out, timestep, n_vertex)
    assert jnp.allclose(y_big, y_big_ref, atol=1e-5, rtol=1e-5)

    # --- branch 2: c_in < c_out (zero-pad channels, plain-JAX glue) -----------
    align_up = AlignPallas(4, 8, key=k_p)
    x2 = jax.random.normal(k_x2, (batch, 4, timestep, n_vertex), jnp.float32)
    y2 = jax.block_until_ready(align_up(x2))
    y2_ref = _reference_align(x2, align_up.weight, align_up.bias, 4, 8)
    assert y2.shape == (batch, 8, timestep, n_vertex)
    assert jnp.allclose(y2, y2_ref)

    # --- branch 3: identity ----------------------------------------------------
    align_id = AlignPallas(c_in, c_in, key=k_p)
    y3 = jax.block_until_ready(align_id(x))
    assert jnp.allclose(y3, x)

    print("KERNEL_OK")
</pallas_src>

<mosaic_0001>
module attributes {stable_mosaic.version = 11 : i64} {
  func.func @_conv1x1_kernel(%arg0: i32, %arg1: i32, %arg2: memref<4x8xf32, #tpu.memory_space<vmem>>, %arg3: memref<4x1xf32, #tpu.memory_space<vmem>>, %arg4: memref<1x8x128xf32, #tpu.memory_space<vmem>>, %arg5: memref<1x4x128xf32, #tpu.memory_space<vmem>>) attributes {dimension_semantics = [#tpu.dimension_semantics<parallel>, #tpu.dimension_semantics<parallel>], iteration_bounds = array<i64: 2, 1>, scalar_prefetch = 0 : i64, scratch_operands = 0 : i64, tpu.core_type = #tpu.core_type<tc>, window_params = [{pipeline_mode = #tpu.pipeline_mode<synchronous>, transform_indices = @transform_0, window_bounds = array<i64: 4, 8>}, {pipeline_mode = #tpu.pipeline_mode<synchronous>, transform_indices = @transform_1, window_bounds = array<i64: 4, 1>}, {transform_indices = @transform_2, window_bounds = array<i64: 1, 8, 128>}, {transform_indices = @transform_3, window_bounds = array<i64: 1, 4, 128>}]} {
    %c0 = arith.constant 0 : index
    %c0_0 = arith.constant 0 : index
    %0 = vector.load %arg2[%c0, %c0_0] : memref<4x8xf32, #tpu.memory_space<vmem>>, vector<4x8xf32>
    %c0_1 = arith.constant 0 : index
    %c0_2 = arith.constant 0 : index
    %1 = vector.load %arg3[%c0_1, %c0_2] : memref<4x1xf32, #tpu.memory_space<vmem>>, vector<4x1xf32>
    %c0_3 = arith.constant 0 : index
    %c0_4 = arith.constant 0 : index
    %c0_5 = arith.constant 0 : index
    %2 = vector.load %arg4[%c0_3, %c0_4, %c0_5] : memref<1x8x128xf32, #tpu.memory_space<vmem>>, vector<1x8x128xf32>
    %3 = vector.shape_cast %2 : vector<1x8x128xf32> to vector<8x128xf32>
    %cst = arith.constant dense<0.000000e+00> : vector<4x128xf32>
    %4 = tpu.matmul %0, %3, %cst {dimension_numbers = #tpu.dot_dimension_numbers<[1], [0], [0], [1], [0, 0, 1, 1], [], []>, precision = #tpu.contract_precision<fp32>} : vector<4x8xf32>, vector<8x128xf32>, vector<4x128xf32> -> vector<4x128xf32>
    %5 = vector.broadcast %1 : vector<4x1xf32> to vector<4x128xf32>
    %6 = arith.addf %4, %5 : vector<4x128xf32>
    %c0_6 = arith.constant 0 : index
    %c0_7 = arith.constant 0 : index
    %c0_8 = arith.constant 0 : index
    %7 = vector.load %arg5[%c0_6, %c0_7, %c0_8] : memref<1x4x128xf32, #tpu.memory_space<vmem>>, vector<1x4x128xf32>
    %8 = vector.shape_cast %7 : vector<1x4x128xf32> to vector<4x128xf32>
    %9 = vector.shape_cast %6 : vector<4x128xf32> to vector<1x4x128xf32>
    tpu.vector_store %arg5[%c0_6, %c0_7, %c0_8], %9 {strides = array<i32>} : memref<1x4x128xf32, #tpu.memory_space<vmem>>, vector<1x4x128xf32>,
    return
  }
  func.func @transform_0(%arg0: i32, %arg1: i32) -> (i32, i32) {
    %c0_i32 = arith.constant 0 : i32
    %c0_i32_0 = arith.constant 0 : i32
    %c0_i32_1 = arith.constant 0 : i32
    return %c0_i32, %c0_i32_0 : i32, i32
  }
  func.func @transform_1(%arg0: i32, %arg1: i32) -> (i32, i32) {
    %c0_i32 = arith.constant 0 : i32
    %c0_i32_0 = arith.constant 0 : i32
    %c0_i32_1 = arith.constant 0 : i32
    return %c0_i32, %c0_i32_0 : i32, i32
  }
  func.func @transform_2(%arg0: i32, %arg1: i32) -> (i32, i32, i32) {
    %c0_i32 = arith.constant 0 : i32
    %c0_i32_0 = arith.constant 0 : i32
    return %arg0, %c0_i32, %arg1 : i32, i32, i32
  }
  func.func @transform_3(%arg0: i32, %arg1: i32) -> (i32, i32, i32) {
    %c0_i32 = arith.constant 0 : i32
    %c0_i32_0 = arith.constant 0 : i32
    return %arg0, %c0_i32, %arg1 : i32, i32, i32
  }
}

</mosaic_0001>

<llo_original>
// kernel: tpu_custom_call.1
$region0: #{tpu_custom_call.1}
  #allocation0 [shape = 'u32[]', space=smem, size = 0x4, offset = 0x4, fixed_abs, tag = 'smem constant byte address 0x4 - core index']
  #allocation1 [shape = 'u32[144,128]{1,0:T(1,128)}', space=vmem, size = 0x12000, scoped, tag = 'internal scratch']
  %s0 = inlined_call_operand.vmem [shape: f32[4,8], index: 0, kind: input, shape index: {}]
  %s1 = inlined_call_operand.vmem [shape: f32[4,1], index: 1, kind: input, shape index: {}]
  %s2 = inlined_call_operand.hbm [shape: f32[2,8,128], index: 2, kind: input, shape index: {}]
  %s3 = inlined_call_operand.hbm [shape: f32[2,4,128], index: 3, kind: output, shape index: {}]
  %s4 = sld [smem:[#allocation0]]
  $region49: #{tpu_custom_call.1} parent=0
    _
  %s6 = ssub.s32 1, %s4
  %s7 = scalar_select 0, %s6, %s4
  $region1: #{tpu_custom_call.1} parent=0
    #allocation2 [shape = 'u8[8192]{0}', space=vmem, size = 0x2000, scoped, tag = 'input window, operand 2']
    #allocation3 [shape = 's32[2]{0}', space=sflag, size = 0x8, scoped, tag = 'scoped memory for tpu_custom_call.1']
    #allocation4 [shape = 's32[2]{0}', space=sflag, size = 0x8, scoped, tag = 'scoped memory for tpu_custom_call.1']
    #allocation5 [shape = 'u8[4096]{0}', space=vmem, size = 0x1000, scoped, tag = 'output window, operand 0']
    %8 = vsyncpa [#allocation3], 0
    %s9 = scalar_lea.sflag [#allocation3], 1
    %10 = vsyncpa %s9, 0
    %11 = vsyncpa [#allocation4], 0
    %s12 = scalar_lea.sflag [#allocation4], 1
    %13 = vsyncpa %s12, 0
    loop: start=0, step=1, limit=4
    $region2: #{tpu_custom_call.1} parent=1 // loop_pre_header
      _
    $region3: #{tpu_custom_call.1} parent=1 // loop_header
      %s15 = sphi 0, %s19
      %p16 = scmp.ge.s32.totalorder %s15, 4
      %s22 = sphi 0, %s34
      %s23 = sphi 0, %s30
      %s24 = sphi 0, %s22
      %s25 = sphi 0, %s23
      %s26 = sphi 0, %s24
      %s27 = sphi 0, %s25
      %s35 = sphi 0, %s35
      %s37 = sphi 0, %s35
      %s38 = sphi 0, %s37
      %s52 = sphi 0, %s38
      %s56 = sphi 0, %s56
      %s58 = sphi 0, %s56
      %s59 = sphi 0, %s58
      %s73 = sphi 0, %s59
      %s81 = sphi 0, %s83
      %s84 = sphi 0, %s81
      %s85 = sphi 0, %s84
      %s101 = sphi 0, %s85
      %s109 = sphi 0, %s111
      %s112 = sphi 0, %s109
      %s113 = sphi 0, %s112
      %s129 = sphi 0, %s113
    $region4: #{tpu_custom_call.1} parent=1 // loop_header_branch
      %18 = sbr.rel (%p16) target = $region8
    $region5: #{tpu_custom_call.1} parent=1 // loop_body
      %s20 = ssub.s32 %s15, 1
      %s21 = ssub.s32 %s15, 2
      %s28 = sadd.s32 1, %s23
      %p29 = scmp.ge.s32.totalorder %s28, 1
      %s30 = scalar_select %p29, 0, %s28
      %s31 = sadd.s32 1, %s22
      %s32 = scalar_select %p29, %s31, %s22
      %p33 = scmp.ge.s32.totalorder %s32, 2
      %s34 = scalar_select %p33, 0, %s32
      %s36 = sadd.s32 %s35, 1
      %p39 = scmp.eq.s32.totalorder %s15, 1
      %p40 = scmp.ne.s32.totalorder %s35, %s37
      %p41 = scmp.eq.s32.totalorder %s15, 0
      %p42 = por %p40, %p41
      %p43 = scmp.ne.s32.totalorder %s35, %s37
      %p44 = scmp.eq.s32.totalorder %s20, 1
      %p45 = por %p43, %p44
      %p46 = scmp.ne.s32.totalorder %s37, %s38
      %p47 = scmp.eq.s32.totalorder %s20, 0
      %p48 = por %p46, %p47
      %p49 = scmp.ne.s32.totalorder %s37, %s38
      %p50 = scmp.eq.s32.totalorder %s21, 1
      %p51 = por %p49, %p50
      %p53 = scmp.ne.s32.totalorder %s38, %s52
      %p54 = scmp.eq.s32.totalorder %s21, 0
      %p55 = por %p53, %p54
      %s57 = sadd.s32 %s56, 1
      %p60 = scmp.eq.s32.totalorder %s15, 1
      %p61 = scmp.ne.s32.totalorder %s56, %s58
      %p62 = scmp.eq.s32.totalorder %s15, 0
      %p63 = por %p61, %p62
      %p64 = scmp.ne.s32.totalorder %s56, %s58
      %p65 = scmp.eq.s32.totalorder %s20, 1
      %p66 = por %p64, %p65
      %p67 = scmp.ne.s32.totalorder %s58, %s59
      %p68 = scmp.eq.s32.totalorder %s20, 0
      %p69 = por %p67, %p68
      %p70 = scmp.ne.s32.totalorder %s58, %s59
      %p71 = scmp.eq.s32.totalorder %s21, 1
      %p72 = por %p70, %p71
      %p74 = scmp.ne.s32.totalorder %s59, %s73
      %p75 = scmp.eq.s32.totalorder %s21, 0
      %p76 = por %p74, %p75
      %s77 = ssub.s32 %s22, %s34
      %s78 = ssub.s32 %s23, %s30
      %s79 = sor.u32 %s77, %s78
      %p80 = scmp.eq.s32.totalorder %s79, 0
      %s82 = sadd.s32 %s81, 1
      %s83 = scalar_select %p80, %s81, %s82
      %p86 = pneg %p80
      %p87 = scmp.eq.s32.totalorder %s15, 1
      %p88 = por %p86, %p87
      %p89 = scmp.ne.s32.totalorder %s81, %s84
      %p90 = scmp.eq.s32.totalorder %s15, 0
      %p91 = por %p89, %p90
      %p92 = scmp.ne.s32.totalorder %s81, %s84
      %p93 = scmp.eq.s32.totalorder %s20, 1
      %p94 = por %p92, %p93
      %p95 = scmp.ne.s32.totalorder %s84, %s85
      %p96 = scmp.eq.s32.totalorder %s20, 0
      %p97 = por %p95, %p96
      %p98 = scmp.ne.s32.totalorder %s84, %s85
      %p99 = scmp.eq.s32.totalorder %s21, 1
      %p100 = por %p98, %p99
      %p102 = scmp.ne.s32.totalorder %s85, %s101
      %p103 = scmp.eq.s32.totalorder %s21, 0
      %p104 = por %p102, %p103
      %s105 = ssub.s32 %s22, %s34
      %s106 = ssub.s32 %s23, %s30
      %s107 = sor.u32 %s105, %s106
      %p108 = scmp.eq.s32.totalorder %s107, 0
      %s110 = sadd.s32 %s109, 1
      %s111 = scalar_select %p108, %s109, %s110
      %p114 = pneg %p108
      %p115 = scmp.eq.s32.totalorder %s15, 1
      %p116 = por %p114, %p115
      %p117 = scmp.ne.s32.totalorder %s109, %s112
      %p118 = scmp.eq.s32.totalorder %s15, 0
      %p119 = por %p117, %p118
      %p120 = scmp.ne.s32.totalorder %s109, %s112
      %p121 = scmp.eq.s32.totalorder %s20, 1
      %p122 = por %p120, %p121
      %p123 = scmp.ne.s32.totalorder %s112, %s113
      %p124 = scmp.eq.s32.totalorder %s20, 0
      %p125 = por %p123, %p124
      %p126 = scmp.ne.s32.totalorder %s112, %s113
      %p127 = scmp.eq.s32.totalorder %s21, 1
      %p128 = por %p126, %p127
      %p130 = scmp.ne.s32.totalorder %s113, %s129
      %p131 = scmp.eq.s32.totalorder %s21, 0
      %p132 = por %p130, %p131
      %p133 = scmp.le.s32.totalorder 1, %s15
      %p134 = scmp.lt.s32.totalorder %s15, 3
      %p135 = pnand %p133, %p134
      %p136 = pneg %p135
      // Predicated region
      $region9: #{tpu_custom_call.1} parent=5 // pred_check
        _
      $region10: #{tpu_custom_call.1} parent=5 // pred_check_branch
        %138 = sbr.rel (%p135) target = $region12
      $region11: #{tpu_custom_call.1} parent=5 // pred_region
        %s139 = ssub.s32 %s15, 1
        // Predicated region
        $region13: #{tpu_custom_call.1} parent=11 // pred_check
          %p140 = pneg %p48
        $region14: #{tpu_custom_call.1} parent=11 // pred_check_branch
          %142 = sbr.rel (%p140) target = $region16
        $region15: #{tpu_custom_call.1} parent=11 // pred_region
          _
        $region16: #{tpu_custom_call.1} parent=11 // pred_fallthru
          _
        // Predicated region
        $region17: #{tpu_custom_call.1} parent=11 // pred_check
          %p143 = pneg %p69
        $region18: #{tpu_custom_call.1} parent=11 // pred_check_branch
          %145 = sbr.rel (%p143) target = $region20
        $region19: #{tpu_custom_call.1} parent=11 // pred_region
          _
        $region20: #{tpu_custom_call.1} parent=11 // pred_fallthru
          _
      $region12: #{tpu_custom_call.1} parent=5 // pred_fallthru
        _
      %p146 = scmp.lt.s32.totalorder %s15, 2
      // Predicated region
      $region21: #{tpu_custom_call.1} parent=5 // pred_check
        %p147 = pneg %p146
      $region22: #{tpu_custom_call.1} parent=5 // pred_check_branch
        %149 = sbr.rel (%p147) target = $region24
      $region23: #{tpu_custom_call.1} parent=5 // pred_region
        // Predicated region
        $region25: #{tpu_custom_call.1} parent=23 // pred_check
          %p150 = pneg %p91
        $region26: #{tpu_custom_call.1} parent=23 // pred_check_branch
          %152 = sbr.rel (%p150) target = $region28
        $region27: #{tpu_custom_call.1} parent=23 // pred_region
          %s153 = sand.u32 %s81, 1
          %s154 = scalar_lea.sflag [#allocation3], %s153
          %s155 = sand.u32 %s81, 1
          %s156 = smul.addr %s155, 8
          %s157 = scalar_lea.vmem [#allocation2], %s156
          %s159 = ssub.s32 128, 128
          %160 = vsyncadd %s154, %s159
          %s161 = sadd.s32 %s23, %s22
          %s162 = smul.addr %s161, 128
          %s163 = scalar_lea.hbm %s2, %s162
          %s165 = sshll.u32 %s157, 4
          %s166 = int_to_ptr.vmem [resolvable:$true] %s165
          %168 = dma.hbm_to_vmem [thread:$0]  %s163, 128, %s166, %s154
        $region28: #{tpu_custom_call.1} parent=23 // pred_fallthru
          _
      $region24: #{tpu_custom_call.1} parent=5 // pred_fallthru
        _
      %p169 = scmp.le.s32.totalorder 1, %s15
      %p170 = scmp.lt.s32.totalorder %s15, 3
      %p171 = pnand %p169, %p170
      %p172 = pneg %p171
      // Predicated region
      $region29: #{tpu_custom_call.1} parent=5 // pred_check
        _
      $region30: #{tpu_custom_call.1} parent=5 // pred_check_branch
        %174 = sbr.rel (%p171) target = $region32
      $region31: #{tpu_custom_call.1} parent=5 // pred_region
        %s175 = ssub.s32 %s15, 1
        %s176 = sand.u32 %s84, 1
        %s177 = scalar_lea.sflag [#allocation3], %s176
        %s178 = sand.u32 %s84, 1
        %s179 = smul.addr %s178, 8
        %s180 = scalar_lea.vmem [#allocation2], %s179
        // Predicated region
        $region33: #{tpu_custom_call.1} parent=31 // pred_check
          %p181 = pneg %p97
        $region34: #{tpu_custom_call.1} parent=31 // pred_check_branch
          %183 = sbr.rel (%p181) target = $region36
        $region35: #{tpu_custom_call.1} parent=31 // pred_region
          %184 = dma.done %s177, 128
        $region36: #{tpu_custom_call.1} parent=31 // pred_fallthru
          _
        %p185 = pneg %p48
        %p186 = pneg %p45
        %p187 = pneg %p69
        %p188 = pneg %p66
        %s189 = sand.u32 %s84, 1
        %s190 = scalar_lea.sflag [#allocation3], %s189
        %s191 = sand.u32 %s84, 1
        %s192 = smul.addr %s191, 8
        %s193 = scalar_lea.vmem [#allocation2], %s192
        %p194 = pneg %p97
        %p195 = pneg %p94
        %p196 = pneg %p125
        %p197 = pneg %p122
        %s198 = sand.u32 %s112, 1
        %s199 = scalar_lea.sflag [#allocation4], %s198
        %s200 = sand.u32 %s112, 1
        %s201 = smul.addr %s200, 4
        %s202 = scalar_lea.vmem [#allocation5], %s201
        %v203 = vld [vmem:[%s0] sm:$0xf]
        %v204 = vld [vmem:[%s1] sm:$0xf]
        %v205 = vld [vmem:[%s180] sm:$0xff]
        %207 = vset.pattern.permute.xlu0 0
        %208 = vperm.xlu0 %207, %v204
        %v209 = vpop.permute.xlu0 %208
        %vm211 = vcmask 64512
        %v213 = vsel %vm211, %v203, 0
        %215 = vmatprep.subr.mxu0 0.0
        %v216 = vand.u32 %v205, 4294901760
        %217 = vmatpush1.msra.mxu0 %v216
        %218 = vmatprep.subr.mxu0 0.0
        %219 = vmatpush1.msra.mxu0 0.0
        %220 = vmatprep.subr.mxu0 0.0
        %221 = vmatpush1.msra.mxu0 0.0
        %222 = vmatprep.subr.mxu0 0.0
        %223 = vmatpush1.msra.mxu0 0.0
        %224 = vmatprep.subr.mxu0 0.0
        %225 = vmatpush1.msra.mxu0 0.0
        %226 = vmatprep.subr.mxu0 0.0
        %227 = vmatpush1.msra.mxu0 0.0
        %228 = vmatprep.subr.mxu0 0.0
        %229 = vmatpush1.msra.mxu0 0.0
        %230 = vmatprep.subr.mxu0 0.0
        %231 = vmatpush1.msra.mxu0 0.0
        %232 = vmatprep.subr.mxu0 0.0
        %233 = vmatpush1.msra.mxu0 0.0
        %234 = vmatprep.subr.mxu0 0.0
        %235 = vmatpush1.msra.mxu0 0.0
        %236 = vmatprep.subr.mxu0 0.0
        %237 = vmatpush1.msra.mxu0 0.0
        %238 = vmatprep.subr.mxu0 0.0
        %239 = vmatpush1.msra.mxu0 0.0
        %240 = vmatprep.subr.mxu0 0.0
        %241 = vmatpush1.msra.mxu0 0.0
        %242 = vmatprep.subr.mxu0 0.0
        %243 = vmatpush1.msra.mxu0 0.0
        %244 = vmatprep.subr.mxu0 0.0
        %245 = vmatpush1.msra.mxu0 0.0
        %246 = vmatprep.subr.mxu0 0.0
        %247 = vmatpush1.msra.mxu0 0.0
        %248 = vmatprep.subr.mxu0 0.0
        %249 = vmatpush1.msra.mxu0 0.0
        %250 = vmatprep.subr.mxu0 0.0
        %251 = vmatpush1.msra.mxu0 0.0
        %252 = vmatprep.subr.mxu0 0.0
        %253 = vmatpush1.msra.mxu0 0.0
        %254 = vmatprep.subr.mxu0 0.0
        %255 = vmatpush1.msra.mxu0 0.0
        %256 = vmatprep.subr.mxu0 0.0
        %257 = vmatpush1.msra.mxu0 0.0
        %258 = vmatprep.subr.mxu0 0.0
        %259 = vmatpush1.msra.mxu0 0.0
        %260 = vmatprep.subr.mxu0 0.0
        %261 = vmatpush1.msra.mxu0 0.0
        %262 = vmatprep.subr.mxu0 0.0
        %263 = vmatpush1.msra.mxu0 0.0
        %264 = vmatprep.subr.mxu0 0.0
        %265 = vmatpush1.msra.mxu0 0.0
        %266 = vmatprep.subr.mxu0 0.0
        %267 = vmatpush1.msra.mxu0 0.0
        %268 = vmatprep.subr.mxu0 0.0
        %269 = vmatpush1.msra.mxu0 0.0
        %270 = vmatprep.subr.mxu0 0.0
        %271 = vmatpush1.msra.mxu0 0.0
        %272 = vmatprep.subr.mxu0 0.0
        %273 = vmatpush1.msra.mxu0 0.0
        %274 = vmatprep.subr.mxu0 0.0
        %275 = vmatpush1.msra.mxu0 0.0
        %276 = vmatprep.subr.mxu0 0.0
        %277 = vmatpush1.msra.mxu0 0.0
        %278 = vmatprep.subr.mxu0 0.0
        %279 = vmatpush1.msra.mxu0 0.0
        %280 = vmatprep.mubr.f32.mxu0 0.0
        %v281 = vand.u32 %v213, 4294901760
        %v282 = vsub.f32 %v213, %v281
        %v283 = vand.u32 %v282, 4294901760
        %v284 = vsub.f32 %v282, %v283
        %v285 = vand.u32 %v284, 4294901760
        %286 = vmatmul.mubr.f32.gmra.mrb[0].mxu0 %v285
        %v287 = vpop.f32.mrb[0].mxu0
        %v288 = vadd.f32 %v209, %v287
        %v289 = vpop.f32.mrb[0].mxu0
        %290 = vdwg.mxu0
        %291 = vmatprep.subr.mxu0 0.0
        %v292 = vand.u32 %v205, 4294901760
        %v293 = vsub.f32 %v205, %v292
        %v294 = vand.u32 %v293, 4294901760
        %v295 = vsub.f32 %v293, %v294
        %v296 = vand.u32 %v295, 4294901760
        %297 = vmatpush1.msra.mxu0 %v296
        %298 = vmatprep.subr.mxu0 0.0
        %299 = vmatpush1.msra.mxu0 0.0
        %300 = vmatprep.subr.mxu0 0.0
        %301 = vmatpush1.msra.mxu0 0.0
        %302 = vmatprep.subr.mxu0 0.0
        %303 = vmatpush1.msra.mxu0 0.0
        %304 = vmatprep.subr.mxu0 0.0
        %305 = vmatpush1.msra.mxu0 0.0
        %306 = vmatprep.subr.mxu0 0.0
        %307 = vmatpush1.msra.mxu0 0.0
        %308 = vmatprep.subr.mxu0 0.0
        %309 = vmatpush1.msra.mxu0 0.0
        %310 = vmatprep.subr.mxu0 0.0
        %311 = vmatpush1.msra.mxu0 0.0
        %312 = vmatprep.subr.mxu0 0.0
        %313 = vmatpush1.msra.mxu0 0.0
        %314 = vmatprep.subr.mxu0 0.0
        %315 = vmatpush1.msra.mxu0 0.0
        %316 = vmatprep.subr.mxu0 0.0
        %317 = vmatpush1.msra.mxu0 0.0
        %318 = vmatprep.subr.mxu0 0.0
        %319 = vmatpush1.msra.mxu0 0.0
        %320 = vmatprep.subr.mxu0 0.0
        %321 = vmatpush1.msra.mxu0 0.0
        %322 = vmatprep.subr.mxu0 0.0
        %323 = vmatpush1.msra.mxu0 0.0
        %324 = vmatprep.subr.mxu0 0.0
        %325 = vmatpush1.msra.mxu0 0.0
        %326 = vmatprep.subr.mxu0 0.0
        %327 = vmatpush1.msra.mxu0 0.0
        %328 = vmatprep.subr.mxu0 0.0
        %329 = vmatpush1.msra.mxu0 0.0
        %330 = vmatprep.subr.mxu0 0.0
        %331 = vmatpush1.msra.mxu0 0.0
        %332 = vmatprep.subr.mxu0 0.0
        %333 = vmatpush1.msra.mxu0 0.0
        %334 = vmatprep.subr.mxu0 0.0
        %335 = vmatpush1.msra.mxu0 0.0
        %336 = vmatprep.subr.mxu0 0.0
        %337 = vmatpush1.msra.mxu0 0.0
        %338 = vmatprep.subr.mxu0 0.0
        %339 = vmatpush1.msra.mxu0 0.0
        %340 = vmatprep.subr.mxu0 0.0
        %341 = vmatpush1.msra.mxu0 0.0
        %342 = vmatprep.subr.mxu0 0.0
        %343 = vmatpush1.msra.mxu0 0.0
        %344 = vmatprep.subr.mxu0 0.0
        %345 = vmatpush1.msra.mxu0 0.0
        %346 = vmatprep.subr.mxu0 0.0
        %347 = vmatpush1.msra.mxu0 0.0
        %348 = vmatprep.subr.mxu0 0.0
        %349 = vmatpush1.msra.mxu0 0.0
        %350 = vmatprep.subr.mxu0 0.0
        %351 = vmatpush1.msra.mxu0 0.0
        %352 = vmatprep.subr.mxu0 0.0
        %353 = vmatpush1.msra.mxu0 0.0
        %354 = vmatprep.subr.mxu0 0.0
        %355 = vmatpush1.msra.mxu0 0.0
        %356 = vmatprep.subr.mxu0 0.0
        %357 = vmatpush1.msra.mxu0 0.0
        %358 = vmatprep.subr.mxu0 0.0
        %359 = vmatpush1.msra.mxu0 0.0
        %360 = vmatprep.mubr.f32.mxu0 0.0
        %v361 = vand.u32 %v213, 4294901760
        %362 = vmatmul.mubr.f32.gmra.mrb[0].mxu0 %v361
        %v363 = vpop.f32.mrb[0].mxu0
        %v364 = vadd.f32 %v288, %v363
        %v365 = vpop.f32.mrb[0].mxu0
        %366 = vdwg.mxu0
        %367 = vmatprep.subr.mxu0 0.0
        %v368 = vand.u32 %v205, 4294901760
        %v369 = vsub.f32 %v205, %v368
        %370 = vmatpush1.msra.mxu0 %v369
        %371 = vmatprep.subr.mxu0 0.0
        %372 = vmatpush1.msra.mxu0 0.0
        %373 = vmatprep.subr.mxu0 0.0
        %374 = vmatpush1.msra.mxu0 0.0
        %375 = vmatprep.subr.mxu0 0.0
        %376 = vmatpush1.msra.mxu0 0.0
        %377 = vmatprep.subr.mxu0 0.0
        %378 = vmatpush1.msra.mxu0 0.0
        %379 = vmatprep.subr.mxu0 0.0
        %380 = vmatpush1.msra.mxu0 0.0
        %381 = vmatprep.subr.mxu0 0.0
        %382 = vmatpush1.msra.mxu0 0.0
        %383 = vmatprep.subr.mxu0 0.0
        %384 = vmatpush1.msra.mxu0 0.0
        %385 = vmatprep.subr.mxu0 0.0
        %386 = vmatpush1.msra.mxu0 0.0
        %387 = vmatprep.subr.mxu0 0.0
        %388 = vmatpush1.msra.mxu0 0.0
        %389 = vmatprep.subr.mxu0 0.0
        %390 = vmatpush1.msra.mxu0 0.0
        %391 = vmatprep.subr.mxu0 0.0
        %392 = vmatpush1.msra.mxu0 0.0
        %393 = vmatprep.subr.mxu0 0.0
        %394 = vmatpush1.msra.mxu0 0.0
        %395 = vmatprep.subr.mxu0 0.0
        %396 = vmatpush1.msra.mxu0 0.0
        %397 = vmatprep.subr.mxu0 0.0
        %398 = vmatpush1.msra.mxu0 0.0
        %399 = vmatprep.subr.mxu0 0.0
        %400 = vmatpush1.msra.mxu0 0.0
        %401 = vmatprep.subr.mxu0 0.0
        %402 = vmatpush1.msra.mxu0 0.0
        %403 = vmatprep.subr.mxu0 0.0
        %404 = vmatpush1.msra.mxu0 0.0
        %405 = vmatprep.subr.mxu0 0.0
        %406 = vmatpush1.msra.mxu0 0.0
        %407 = vmatprep.subr.mxu0 0.0
        %408 = vmatpush1.msra.mxu0 0.0
        %409 = vmatprep.subr.mxu0 0.0
        %410 = vmatpush1.msra.mxu0 0.0
        %411 = vmatprep.subr.mxu0 0.0
        %412 = vmatpush1.msra.mxu0 0.0
        %413 = vmatprep.subr.mxu0 0.0
        %414 = vmatpush1.msra.mxu0 0.0
        %415 = vmatprep.subr.mxu0 0.0
        %416 = vmatpush1.msra.mxu0 0.0
        %417 = vmatprep.subr.mxu0 0.0
        %418 = vmatpush1.msra.mxu0 0.0
        %419 = vmatprep.subr.mxu0 0.0
        %420 = vmatpush1.msra.mxu0 0.0
        %421 = vmatprep.subr.mxu0 0.0
        %422 = vmatpush1.msra.mxu0 0.0
        %423 = vmatprep.subr.mxu0 0.0
        %424 = vmatpush1.msra.mxu0 0.0
        %425 = vmatprep.subr.mxu0 0.0
        %426 = vmatpush1.msra.mxu0 0.0
        %427 = vmatprep.subr.mxu0 0.0
        %428 = vmatpush1.msra.mxu0 0.0
        %429 = vmatprep.subr.mxu0 0.0
        %430 = vmatpush1.msra.mxu0 0.0
        %431 = vmatprep.subr.mxu0 0.0
        %432 = vmatpush1.msra.mxu0 0.0
        %433 = vmatprep.mubr.f32.mxu0 0.0
        %v434 = vand.u32 %v213, 4294901760
        %v435 = vsub.f32 %v213, %v434
        %436 = vmatmul.mubr.f32.gmra.mrb[0].mxu0 %v435
        %v437 = vpop.f32.mrb[0].mxu0
        %v438 = vadd.f32 %v364, %v437
        %v439 = vpop.f32.mrb[0].mxu0
        %440 = vdwg.mxu0
        %441 = vmatprep.subr.mxu0 0.0
        %v442 = vand.u32 %v205, 4294901760
        %443 = vmatpush1.msra.mxu0 %v442
        %444 = vmatprep.subr.mxu0 0.0
        %445 = vmatpush1.msra.mxu0 0.0
        %446 = vmatprep.subr.mxu0 0.0
        %447 = vmatpush1.msra.mxu0 0.0
        %448 = vmatprep.subr.mxu0 0.0
        %449 = vmatpush1.msra.mxu0 0.0
        %450 = vmatprep.subr.mxu0 0.0
        %451 = vmatpush1.msra.mxu0 0.0
        %452 = vmatprep.subr.mxu0 0.0
        %453 = vmatpush1.msra.mxu0 0.0
        %454 = vmatprep.subr.mxu0 0.0
        %455 = vmatpush1.msra.mxu0 0.0
        %456 = vmatprep.subr.mxu0 0.0
        %457 = vmatpush1.msra.mxu0 0.0
        %458 = vmatprep.subr.mxu0 0.0
        %459 = vmatpush1.msra.mxu0 0.0
        %460 = vmatprep.subr.mxu0 0.0
        %461 = vmatpush1.msra.mxu0 0.0
        %462 = vmatprep.subr.mxu0 0.0
        %463 = vmatpush1.msra.mxu0 0.0
        %464 = vmatprep.subr.mxu0 0.0
        %465 = vmatpush1.msra.mxu0 0.0
        %466 = vmatprep.subr.mxu0 0.0
        %467 = vmatpush1.msra.mxu0 0.0
        %468 = vmatprep.subr.mxu0 0.0
        %469 = vmatpush1.msra.mxu0 0.0
        %470 = vmatprep.subr.mxu0 0.0
        %471 = vmatpush1.msra.mxu0 0.0
        %472 = vmatprep.subr.mxu0 0.0
        %473 = vmatpush1.msra.mxu0 0.0
        %474 = vmatprep.subr.mxu0 0.0
        %475 = vmatpush1.msra.mxu0 0.0
        %476 = vmatprep.subr.mxu0 0.0
        %477 = vmatpush1.msra.mxu0 0.0
        %478 = vmatprep.subr.mxu0 0.0
        %479 = vmatpush1.msra.mxu0 0.0
        %480 = vmatprep.subr.mxu0 0.0
        %481 = vmatpush1.msra.mxu0 0.0
        %482 = vmatprep.subr.mxu0 0.0
        %483 = vmatpush1.msra.mxu0 0.0
        %484 = vmatprep.subr.mxu0 0.0
        %485 = vmatpush1.msra.mxu0 0.0
        %486 = vmatprep.subr.mxu0 0.0
        %487 = vmatpush1.msra.mxu0 0.0
        %488 = vmatprep.subr.mxu0 0.0
        %489 = vmatpush1.msra.mxu0 0.0
        %490 = vmatprep.subr.mxu0 0.0
        %491 = vmatpush1.msra.mxu0 0.0
        %492 = vmatprep.subr.mxu0 0.0
        %493 = vmatpush1.msra.mxu0 0.0
        %494 = vmatprep.subr.mxu0 0.0
        %495 = vmatpush1.msra.mxu0 0.0
        %496 = vmatprep.subr.mxu0 0.0
        %497 = vmatpush1.msra.mxu0 0.0
        %498 = vmatprep.subr.mxu0 0.0
        %499 = vmatpush1.msra.mxu0 0.0
        %500 = vmatprep.subr.mxu0 0.0
        %501 = vmatpush1.msra.mxu0 0.0
        %502 = vmatprep.subr.mxu0 0.0
        %503 = vmatpush1.msra.mxu0 0.0
        %504 = vmatprep.subr.mxu0 0.0
        %505 = vmatpush1.msra.mxu0 0.0
        %506 = vmatprep.mubr.f32.mxu0 0.0
        %v507 = vand.u32 %v213, 4294901760
        %v508 = vsub.f32 %v213, %v507
        %v509 = vand.u32 %v508, 4294901760
        %510 = vmatmul.mubr.f32.gmra.mrb[0].mxu0 %v509
        %v511 = vpop.f32.mrb[0].mxu0
        %v512 = vadd.f32 %v438, %v511
        %v513 = vpop.f32.mrb[0].mxu0
        %514 = vdwg.mxu0
        %515 = vmatprep.subr.mxu0 0.0
        %v516 = vand.u32 %v205, 4294901760
        %v517 = vsub.f32 %v205, %v516
        %v518 = vand.u32 %v517, 4294901760
        %519 = vmatpush1.msra.mxu0 %v518
        %520 = vmatprep.subr.mxu0 0.0
        %521 = vmatpush1.msra.mxu0 0.0
        %522 = vmatprep.subr.mxu0 0.0
        %523 = vmatpush1.msra.mxu0 0.0
        %524 = vmatprep.subr.mxu0 0.0
        %525 = vmatpush1.msra.mxu0 0.0
        %526 = vmatprep.subr.mxu0 0.0
        %527 = vmatpush1.msra.mxu0 0.0
        %528 = vmatprep.subr.mxu0 0.0
        %529 = vmatpush1.msra.mxu0 0.0
        %530 = vmatprep.subr.mxu0 0.0
        %531 = vmatpush1.msra.mxu0 0.0
        %532 = vmatprep.subr.mxu0 0.0
        %533 = vmatpush1.msra.mxu0 0.0
        %534 = vmatprep.subr.mxu0 0.0
        %535 = vmatpush1.msra.mxu0 0.0
        %536 = vmatprep.subr.mxu0 0.0
        %537 = vmatpush1.msra.mxu0 0.0
        %538 = vmatprep.subr.mxu0 0.0
        %539 = vmatpush1.msra.mxu0 0.0
        %540 = vmatprep.subr.mxu0 0.0
        %541 = vmatpush1.msra.mxu0 0.0
        %542 = vmatprep.subr.mxu0 0.0
        %543 = vmatpush1.msra.mxu0 0.0
        %544 = vmatprep.subr.mxu0 0.0
        %545 = vmatpush1.msra.mxu0 0.0
        %546 = vmatprep.subr.mxu0 0.0
        %547 = vmatpush1.msra.mxu0 0.0
        %548 = vmatprep.subr.mxu0 0.0
        %549 = vmatpush1.msra.mxu0 0.0
        %550 = vmatprep.subr.mxu0 0.0
        %551 = vmatpush1.msra.mxu0 0.0
        %552 = vmatprep.subr.mxu0 0.0
        %553 = vmatpush1.msra.mxu0 0.0
        %554 = vmatprep.subr.mxu0 0.0
        %555 = vmatpush1.msra.mxu0 0.0
        %556 = vmatprep.subr.mxu0 0.0
        %557 = vmatpush1.msra.mxu0 0.0
        %558 = vmatprep.subr.mxu0 0.0
        %559 = vmatpush1.msra.mxu0 0.0
        %560 = vmatprep.subr.mxu0 0.0
        %561 = vmatpush1.msra.mxu0 0.0
        %562 = vmatprep.subr.mxu0 0.0
        %563 = vmatpush1.msra.mxu0 0.0
        %564 = vmatprep.subr.mxu0 0.0
        %565 = vmatpush1.msra.mxu0 0.0
        %566 = vmatprep.subr.mxu0 0.0
        %567 = vmatpush1.msra.mxu0 0.0
        %568 = vmatprep.subr.mxu0 0.0
        %569 = vmatpush1.msra.mxu0 0.0
        %570 = vmatprep.subr.mxu0 0.0
        %571 = vmatpush1.msra.mxu0 0.0
        %572 = vmatprep.subr.mxu0 0.0
        %573 = vmatpush1.msra.mxu0 0.0
        %574 = vmatprep.subr.mxu0 0.0
        %575 = vmatpush1.msra.mxu0 0.0
        %576 = vmatprep.subr.mxu0 0.0
        %577 = vmatpush1.msra.mxu0 0.0
        %578 = vmatprep.subr.mxu0 0.0
        %579 = vmatpush1.msra.mxu0 0.0
        %580 = vmatprep.subr.mxu0 0.0
        %581 = vmatpush1.msra.mxu0 0.0
        %582 = vmatprep.mubr.f32.mxu0 0.0
        %v583 = vand.u32 %v213, 4294901760
        %584 = vmatmul.mubr.f32.gmra.mrb[0].mxu0 %v583
        %v585 = vpop.f32.mrb[0].mxu0
        %v586 = vadd.f32 %v512, %v585
        %v587 = vpop.f32.mrb[0].mxu0
        %588 = vdwg.mxu0
        %589 = vmatprep.subr.mxu0 0.0
        %v590 = vand.u32 %v205, 4294901760
        %591 = vmatpush1.msra.mxu0 %v590
        %592 = vmatprep.subr.mxu0 0.0
        %593 = vmatpush1.msra.mxu0 0.0
        %594 = vmatprep.subr.mxu0 0.0
        %595 = vmatpush1.msra.mxu0 0.0
        %596 = vmatprep.subr.mxu0 0.0
        %597 = vmatpush1.msra.mxu0 0.0
        %598 = vmatprep.subr.mxu0 0.0
        %599 = vmatpush1.msra.mxu0 0.0
        %600 = vmatprep.subr.mxu0 0.0
        %601 = vmatpush1.msra.mxu0 0.0
        %602 = vmatprep.subr.mxu0 0.0
        %603 = vmatpush1.msra.mxu0 0.0
        %604 = vmatprep.subr.mxu0 0.0
        %605 = vmatpush1.msra.mxu0 0.0
        %606 = vmatprep.subr.mxu0 0.0
        %607 = vmatpush1.msra.mxu0 0.0
        %608 = vmatprep.subr.mxu0 0.0
        %609 = vmatpush1.msra.mxu0 0.0
        %610 = vmatprep.subr.mxu0 0.0
        %611 = vmatpush1.msra.mxu0 0.0
        %612 = vmatprep.subr.mxu0 0.0
        %613 = vmatpush1.msra.mxu0 0.0
        %614 = vmatprep.subr.mxu0 0.0
        %615 = vmatpush1.msra.mxu0 0.0
        %616 = vmatprep.subr.mxu0 0.0
        %617 = vmatpush1.msra.mxu0 0.0
        %618 = vmatprep.subr.mxu0 0.0
        %619 = vmatpush1.msra.mxu0 0.0
        %620 = vmatprep.subr.mxu0 0.0
        %621 = vmatpush1.msra.mxu0 0.0
        %622 = vmatprep.subr.mxu0 0.0
        %623 = vmatpush1.msra.mxu0 0.0
        %624 = vmatprep.subr.mxu0 0.0
        %625 = vmatpush1.msra.mxu0 0.0
        %626 = vmatprep.subr.mxu0 0.0
        %627 = vmatpush1.msra.mxu0 0.0
        %628 = vmatprep.subr.mxu0 0.0
        %629 = vmatpush1.msra.mxu0 0.0
        %630 = vmatprep.subr.mxu0 0.0
        %631 = vmatpush1.msra.mxu0 0.0
        %632 = vmatprep.subr.mxu0 0.0
        %633 = vmatpush1.msra.mxu0 0.0
        %634 = vmatprep.subr.mxu0 0.0
        %635 = vmatpush1.msra.mxu0 0.0
        %636 = vmatprep.subr.mxu0 0.0
        %637 = vmatpush1.msra.mxu0 0.0
        %638 = vmatprep.subr.mxu0 0.0
        %639 = vmatpush1.msra.mxu0 0.0
        %640 = vmatprep.subr.mxu0 0.0
        %641 = vmatpush1.msra.mxu0 0.0
        %642 = vmatprep.subr.mxu0 0.0
        %643 = vmatpush1.msra.mxu0 0.0
        %644 = vmatprep.subr.mxu0 0.0
        %645 = vmatpush1.msra.mxu0 0.0
        %646 = vmatprep.subr.mxu0 0.0
        %647 = vmatpush1.msra.mxu0 0.0
        %648 = vmatprep.subr.mxu0 0.0
        %649 = vmatpush1.msra.mxu0 0.0
        %650 = vmatprep.subr.mxu0 0.0
        %651 = vmatpush1.msra.mxu0 0.0
        %652 = vmatprep.subr.mxu0 0.0
        %653 = vmatpush1.msra.mxu0 0.0
        %654 = vmatprep.mubr.f32.mxu0 0.0
        %v655 = vand.u32 %v213, 4294901760
        %656 = vmatmul.mubr.f32.gmra.mrb[0].mxu0 %v655
        %v657 = vpop.f32.mrb[0].mxu0
        %v658 = vadd.f32 %v586, %v657
        %v659 = vpop.f32.mrb[0].mxu0
        %660 = vdwg.mxu0
        %661 = vst [vmem:[%s202] sm:$0xf] %v658
        %s662 = sand.u32 %s112, 1
        %s663 = scalar_lea.sflag [#allocation4], %s662
        %s664 = sand.u32 %s112, 1
        %s665 = smul.addr %s664, 4
        %s666 = scalar_lea.vmem [#allocation5], %s665
        // Predicated region
        $region37: #{tpu_custom_call.1} parent=31 // pred_check
          %p667 = pneg %p122
        $region38: #{tpu_custom_call.1} parent=31 // pred_check_branch
          %669 = sbr.rel (%p667) target = $region40
        $region39: #{tpu_custom_call.1} parent=31 // pred_region
          %s671 = ssub.s32 64, 64
          %672 = vsyncadd %s663, %s671
          %s673 = sadd.s32 %s25, %s24
          %s674 = smul.addr %s673, 64
          %s675 = scalar_lea.hbm %s3, %s674
          %s677 = sshll.u32 %s666, 4
          %s678 = int_to_ptr.vmem [resolvable:$true] %s677
          %680 = dma.vmem_to_hbm [thread:$0]  %s678, 64, %s675, %s663
        $region40: #{tpu_custom_call.1} parent=31 // pred_fallthru
          _
      $region32: #{tpu_custom_call.1} parent=5 // pred_fallthru
        _
      %p681 = scmp.le.s32.totalorder 2, %s15
      // Predicated region
      $region41: #{tpu_custom_call.1} parent=5 // pred_check
        %p682 = pneg %p681
      $region42: #{tpu_custom_call.1} parent=5 // pred_check_branch
        %684 = sbr.rel (%p682) target = $region44
      $region43: #{tpu_custom_call.1} parent=5 // pred_region
        %s685 = ssub.s32 %s15, 2
        // Predicated region
        $region45: #{tpu_custom_call.1} parent=43 // pred_check
          %p686 = pneg %p128
        $region46: #{tpu_custom_call.1} parent=43 // pred_check_branch
          %688 = sbr.rel (%p686) target = $region48
        $region47: #{tpu_custom_call.1} parent=43 // pred_region
          %s689 = sand.u32 %s113, 1
          %s690 = scalar_lea.sflag [#allocation4], %s689
          %s691 = sand.u32 %s113, 1
          %s692 = smul.addr %s691, 4
          %s693 = scalar_lea.vmem [#allocation5], %s692
          %694 = dma.done %s690, 64
        $region48: #{tpu_custom_call.1} parent=43 // pred_fallthru
          _
      $region44: #{tpu_custom_call.1} parent=5 // pred_fallthru
        _
    $region6: #{tpu_custom_call.1} parent=1 // loop_footer
      %s19 = sadd.s32 1, %s15
    $region7: #{tpu_custom_call.1} parent=1 // loop_footer_branch
      %14 = sbr.rel target = $region3
    $region8: #{tpu_custom_call.1} parent=1 // loop_exit
      _
    %695 = vsyncpa [#allocation3], 1
    %s696 = scalar_lea.sflag [#allocation3], 1
    %697 = vsyncpa %s696, 1
    %698 = vsyncpa [#allocation4], 1
    %s699 = scalar_lea.sflag [#allocation4], 1
    %700 = vsyncpa %s699, 1

</llo_original>
